<compile_context>
chip_gen: v5e
topology: v5e:2x2
jax: 0.10.0
libtpu: 0.0.40
codegen_flags: <defaults>
</compile_context>

<pallas_src>
import math

import jax
import jax.numpy as jnp
from jax.experimental import pallas as pl
from jax.experimental.pallas import tpu as pltpu


INPUT_DIM = 2
HIDDEN_DIM = 20
NUM_ACTIVATIONS = 6


def _act_gen_kernel(x_ref, w1_ref, b1_ref, w2_ref, b2_ref, out_ref):
    """Fused MLP (Linear -> ReLU -> Linear) + softmax, batch on lanes.

    Shapes inside the kernel (bt = batch tile on the lane axis):
      x_ref  : (in_dim, bt)      w1_ref : (hidden, in_dim)   b1_ref : (hidden, 1)
      w2_ref : (num_act, hidden) b2_ref : (num_act, 1)       out_ref: (num_act, bt)
    """
    in_dim = x_ref.shape[0]

    # ---- Layer 1 on the VPU: K=in_dim (=2) broadcast FMAs ((hidden,1)*(1,bt)). ----
    h = b1_ref[...]  # (hidden, 1) -> broadcasts over lanes
    for c in range(in_dim):  # static unroll, in_dim = 2
        h = h + w1_ref[:, c : c + 1] * x_ref[c : c + 1, :]
    h = jnp.maximum(h, 0.0)  # (hidden, bt)

    # ---- Layer 2: one small MXU matmul with a lane-dense (num_act, bt) result. ----
    logits = (
        jnp.dot(w2_ref[...], h, preferred_element_type=jnp.float32)
        + b2_ref[...]
    )  # (num_act, bt)

    # ---- Softmax over the num_act sublane rows (torch dim=1). ----
    m = jnp.max(logits, axis=0, keepdims=True)      # (1, bt) native sublane reduce
    e = jnp.exp(logits - m)                         # (num_act, bt)
    denom = jnp.sum(e, axis=0, keepdims=True)       # (1, bt)
    out_ref[...] = (e / denom).astype(out_ref.dtype)  # exact divide; EUP has slack


def _round_up(n, m):
    return ((n + m - 1) // m) * m


def _choose_batch_tile(batch, requested=None, *, max_tile=32768, min_tiles=2):
    """Pick a lane-dense batch tile.

    Large tiles amortize the ~0.35 us per-grid-step overhead and make each DMA
    segment roofline-sized; keeping >= min_tiles grid steps lets the
    "parallel" batch axis shard across both v7x TensorCores; small batches are
    only padded up to the next 128-lane multiple, not to a huge tile.
    """
    if requested is not None:
        bt = int(requested)
        assert bt % 128 == 0, "batch_tile must be a multiple of 128 (lane width)"
        return bt
    bt = _round_up(max(pl.cdiv(batch, min_tiles), 128), 128)
    return min(bt, max_tile)


def activation_generator_forward(
    x, w1, b1, w2, b2, *, batch_tile=None, out_dtype=jnp.float32,
    transposed_output=False,
):
    """Forward pass.

    x : (B, in_dim) float32
    w1: (hidden, in_dim), b1: (hidden,)      -- torch nn.Linear layout
    w2: (num_act, hidden), b2: (num_act,)
    Returns softmax weights: (B, num_act), or (num_act, B) if
    transposed_output=True (saves the output-transpose HBM pass for consumers
    that can read the batch-on-lanes layout directly).
    """
    B, in_dim = x.shape
    hidden, in_dim2 = w1.shape
    assert in_dim == in_dim2
    num_act, hidden2 = w2.shape
    assert hidden == hidden2

    bt = _choose_batch_tile(B, batch_tile)
    num_tiles = pl.cdiv(B, bt)
    B_pad = num_tiles * bt

    # Pad (batch rows) and transpose in one shot so XLA fuses it into a single
    # copy; skip padding entirely when B is already a tile multiple.
    xf = x.astype(jnp.float32)
    if B_pad != B:
        xf = jnp.pad(xf, ((0, B_pad - B), (0, 0)))
    x_t = xf.T  # (in_dim, B_pad): batch on lanes

    b1c = b1.reshape(hidden, 1).astype(jnp.float32)
    b2c = b2.reshape(num_act, 1).astype(jnp.float32)

    out_t = pl.pallas_call(
        _act_gen_kernel,
        out_shape=jax.ShapeDtypeStruct((num_act, B_pad), out_dtype),
        grid_spec=pltpu.PrefetchScalarGridSpec(
            num_scalar_prefetch=0,
            grid=(num_tiles,),
            in_specs=[
                pl.BlockSpec((in_dim, bt), lambda i: (0, i)),       # x^T tile (lane-dense)
                pl.BlockSpec((hidden, in_dim), lambda i: (0, 0)),   # W1 (resident)
                pl.BlockSpec((hidden, 1), lambda i: (0, 0)),        # b1 column
                pl.BlockSpec((num_act, hidden), lambda i: (0, 0)),  # W2 (resident)
                pl.BlockSpec((num_act, 1), lambda i: (0, 0)),       # b2 column
            ],
            out_specs=pl.BlockSpec((num_act, bt), lambda i: (0, i)),
        ),
        compiler_params=pltpu.CompilerParams(
            dimension_semantics=("parallel",),  # batch tiles shard across v7x's 2 TCs
            vmem_limit_bytes=32 << 20,          # > v5e's 16 MiB default, safe on v7x
        ),
    )(x_t, w1.astype(jnp.float32), b1c, w2.astype(jnp.float32), b2c)

    out_t = out_t[:, :B]
    if transposed_output:
        return out_t           # (num_act, B)
    return out_t.T             # (B, num_act): matches the torch module


def init_params(key):
    """xavier_normal_ weights + zero biases (torch layout: W is (out, in))."""
    k1, k2 = jax.random.split(key)

    def xavier_normal(k, fan_out, fan_in):
        std = math.sqrt(2.0 / (fan_in + fan_out))
        return std * jax.random.normal(k, (fan_out, fan_in), dtype=jnp.float32)

    w1 = xavier_normal(k1, HIDDEN_DIM, INPUT_DIM)
    b1 = jnp.zeros((HIDDEN_DIM,), dtype=jnp.float32)
    w2 = xavier_normal(k2, NUM_ACTIVATIONS, HIDDEN_DIM)
    b2 = jnp.zeros((NUM_ACTIVATIONS,), dtype=jnp.float32)
    return w1, b1, w2, b2


def reference_forward(x, w1, b1, w2, b2):
    """Pure-JAX reference of the torch forward."""
    h = jnp.maximum(x @ w1.T + b1, 0.0)
    logits = h @ w2.T + b2
    return jax.nn.softmax(logits, axis=1)


if __name__ == "__main__":
    key = jax.random.PRNGKey(0)
    pk, xk = jax.random.split(key)

    w1, b1, w2, b2 = init_params(pk)

    # Small deterministic input: 300 PINN collocation points in 2-D (x, t).
    # 300 is not a 128-multiple, so the padding path is exercised; the auto
    # tile picker gives bt=256 -> 2 grid steps (both TCs get a tile on v7x).
    batch = 300
    x = jax.random.normal(xk, (batch, INPUT_DIM), dtype=jnp.float32)

    out = activation_generator_forward(x, w1, b1, w2, b2)
    out = jax.block_until_ready(out)

    # Correctness: exact softmax divide -> tight tolerances now hold.
    ref = reference_forward(x, w1, b1, w2, b2)
    assert out.shape == (batch, NUM_ACTIVATIONS)
    assert jnp.allclose(out, ref, atol=1e-5, rtol=1e-5), float(
        jnp.max(jnp.abs(out - ref))
    )
    assert jnp.allclose(jnp.sum(out, axis=1), jnp.ones((batch,)), atol=1e-5)

    print("KERNEL_OK")
</pallas_src>

<mosaic_0001>
module attributes {stable_mosaic.version = 11 : i64} {
  func.func @_act_gen_kernel(%arg0: i32, %arg1: memref<2x256xf32, #tpu.memory_space<vmem>>, %arg2: memref<20x2xf32, #tpu.memory_space<vmem>>, %arg3: memref<20x1xf32, #tpu.memory_space<vmem>>, %arg4: memref<6x20xf32, #tpu.memory_space<vmem>>, %arg5: memref<6x1xf32, #tpu.memory_space<vmem>>, %arg6: memref<6x256xf32, #tpu.memory_space<vmem>>) attributes {dimension_semantics = [#tpu.dimension_semantics<parallel>], iteration_bounds = array<i64: 2>, scalar_prefetch = 0 : i64, scratch_operands = 0 : i64, tpu.core_type = #tpu.core_type<tc>, window_params = [{transform_indices = @transform_0, window_bounds = array<i64: 2, 256>}, {pipeline_mode = #tpu.pipeline_mode<synchronous>, transform_indices = @transform_1, window_bounds = array<i64: 20, 2>}, {pipeline_mode = #tpu.pipeline_mode<synchronous>, transform_indices = @transform_2, window_bounds = array<i64: 20, 1>}, {pipeline_mode = #tpu.pipeline_mode<synchronous>, transform_indices = @transform_3, window_bounds = array<i64: 6, 20>}, {pipeline_mode = #tpu.pipeline_mode<synchronous>, transform_indices = @transform_4, window_bounds = array<i64: 6, 1>}, {transform_indices = @transform_5, window_bounds = array<i64: 6, 256>}]} {
    %c0 = arith.constant 0 : index
    %c0_0 = arith.constant 0 : index
    %0 = vector.load %arg3[%c0, %c0_0] : memref<20x1xf32, #tpu.memory_space<vmem>>, vector<20x1xf32>
    %c0_1 = arith.constant 0 : index
    %c0_2 = arith.constant 0 : index
    %1 = vector.load %arg2[%c0_1, %c0_2] : memref<20x2xf32, #tpu.memory_space<vmem>>, vector<20x1xf32>
    %c0_3 = arith.constant 0 : index
    %c0_4 = arith.constant 0 : index
    %2 = vector.load %arg1[%c0_3, %c0_4] : memref<2x256xf32, #tpu.memory_space<vmem>>, vector<1x256xf32>
    %3 = vector.broadcast %1 : vector<20x1xf32> to vector<20x256xf32>
    %4 = vector.broadcast %2 : vector<1x256xf32> to vector<20x256xf32>
    %5 = arith.mulf %3, %4 : vector<20x256xf32>
    %6 = vector.broadcast %0 : vector<20x1xf32> to vector<20x256xf32>
    %7 = arith.addf %6, %5 : vector<20x256xf32>
    %c0_5 = arith.constant 0 : index
    %c1 = arith.constant 1 : index
    %8 = vector.load %arg2[%c0_5, %c1] : memref<20x2xf32, #tpu.memory_space<vmem>>, vector<20x1xf32>
    %c1_6 = arith.constant 1 : index
    %c0_7 = arith.constant 0 : index
    %9 = vector.load %arg1[%c1_6, %c0_7] : memref<2x256xf32, #tpu.memory_space<vmem>>, vector<1x256xf32>
    %10 = vector.broadcast %8 : vector<20x1xf32> to vector<20x256xf32>
    %11 = vector.broadcast %9 : vector<1x256xf32> to vector<20x256xf32>
    %12 = arith.mulf %10, %11 : vector<20x256xf32>
    %13 = arith.addf %7, %12 : vector<20x256xf32>
    %cst = arith.constant 0.000000e+00 : f32
    %14 = vector.broadcast %cst : f32 to vector<20x256xf32>
    %15 = arith.maximumf %13, %14 : vector<20x256xf32>
    %c0_8 = arith.constant 0 : index
    %c0_9 = arith.constant 0 : index
    %16 = vector.load %arg4[%c0_8, %c0_9] : memref<6x20xf32, #tpu.memory_space<vmem>>, vector<6x20xf32>
    %cst_10 = arith.constant dense<0.000000e+00> : vector<6x256xf32>
    %17 = tpu.matmul %16, %15, %cst_10 {dimension_numbers = #tpu.dot_dimension_numbers<[1], [0], [0], [1], [0, 0, 1, 1], [], []>} : vector<6x20xf32>, vector<20x256xf32>, vector<6x256xf32> -> vector<6x256xf32>
    %c0_11 = arith.constant 0 : index
    %c0_12 = arith.constant 0 : index
    %18 = vector.load %arg5[%c0_11, %c0_12] : memref<6x1xf32, #tpu.memory_space<vmem>>, vector<6x1xf32>
    %19 = vector.broadcast %18 : vector<6x1xf32> to vector<6x256xf32>
    %20 = arith.addf %17, %19 : vector<6x256xf32>
    %cst_13 = arith.constant dense<0xFF800000> : vector<256xf32>
    %21 = vector.multi_reduction <maximumf>, %20, %cst_13 [0] : vector<6x256xf32> to vector<256xf32>
    %22 = vector.shape_cast %21 : vector<256xf32> to vector<1x256xf32>
    %23 = vector.broadcast %22 : vector<1x256xf32> to vector<6x256xf32>
    %24 = arith.subf %20, %23 : vector<6x256xf32>
    %25 = math.exp %24 : vector<6x256xf32>
    %cst_14 = arith.constant dense<0.000000e+00> : vector<256xf32>
    %26 = vector.multi_reduction <add>, %25, %cst_14 [0] : vector<6x256xf32> to vector<256xf32>
    %27 = vector.shape_cast %26 : vector<256xf32> to vector<1x256xf32>
    %28 = vector.broadcast %27 : vector<1x256xf32> to vector<6x256xf32>
    %29 = arith.divf %25, %28 : vector<6x256xf32>
    %c0_15 = arith.constant 0 : index
    %c0_16 = arith.constant 0 : index
    %30 = vector.load %arg6[%c0_15, %c0_16] : memref<6x256xf32, #tpu.memory_space<vmem>>, vector<6x256xf32>
    tpu.vector_store %arg6[%c0_15, %c0_16], %29 {strides = array<i32>} : memref<6x256xf32, #tpu.memory_space<vmem>>, vector<6x256xf32>,
    return
  }
  func.func @transform_0(%arg0: i32) -> (i32, i32) {
    %c0_i32 = arith.constant 0 : i32
    %c0_i32_0 = arith.constant 0 : i32
    return %c0_i32, %arg0 : i32, i32
  }
  func.func @transform_1(%arg0: i32) -> (i32, i32) {
    %c0_i32 = arith.constant 0 : i32
    %c0_i32_0 = arith.constant 0 : i32
    %c0_i32_1 = arith.constant 0 : i32
    return %c0_i32, %c0_i32_0 : i32, i32
  }
  func.func @transform_2(%arg0: i32) -> (i32, i32) {
    %c0_i32 = arith.constant 0 : i32
    %c0_i32_0 = arith.constant 0 : i32
    %c0_i32_1 = arith.constant 0 : i32
    return %c0_i32, %c0_i32_0 : i32, i32
  }
  func.func @transform_3(%arg0: i32) -> (i32, i32) {
    %c0_i32 = arith.constant 0 : i32
    %c0_i32_0 = arith.constant 0 : i32
    %c0_i32_1 = arith.constant 0 : i32
    return %c0_i32, %c0_i32_0 : i32, i32
  }
  func.func @transform_4(%arg0: i32) -> (i32, i32) {
    %c0_i32 = arith.constant 0 : i32
    %c0_i32_0 = arith.constant 0 : i32
    %c0_i32_1 = arith.constant 0 : i32
    return %c0_i32, %c0_i32_0 : i32, i32
  }
  func.func @transform_5(%arg0: i32) -> (i32, i32) {
    %c0_i32 = arith.constant 0 : i32
    %c0_i32_0 = arith.constant 0 : i32
    return %c0_i32, %arg0 : i32, i32
  }
}

</mosaic_0001>

<llo_original>
// kernel: tpu_custom_call.1
$region0: #{tpu_custom_call.1}
  #allocation0 [shape = 'u32[]', space=smem, size = 0x4, offset = 0x4, fixed_abs, tag = 'smem constant byte address 0x4 - core index']
  #allocation1 [shape = 'u32[72,128]{1,0:T(1,128)}', space=vmem, size = 0x9000, scoped, tag = 'internal scratch']
  %s0 = inlined_call_operand.vmem [shape: f32[2,512], index: 0, kind: input, shape index: {}]
  %s1 = inlined_call_operand.vmem [shape: f32[20,2], index: 1, kind: input, shape index: {}]
  %s2 = inlined_call_operand.vmem [shape: f32[20,1], index: 2, kind: input, shape index: {}]
  %s3 = inlined_call_operand.vmem [shape: f32[6,20], index: 3, kind: input, shape index: {}]
  %s4 = inlined_call_operand.vmem [shape: f32[6,1], index: 4, kind: input, shape index: {}]
  %s5 = inlined_call_operand.hbm [shape: f32[6,512], index: 5, kind: output, shape index: {}]
  %s6 = sld [smem:[#allocation0]]
  $region53: #{tpu_custom_call.1} parent=0
    _
  %s8 = ssub.s32 1, %s6
  %s9 = scalar_select 0, %s8, %s6
  $region1: #{tpu_custom_call.1} parent=0
    #allocation2 [shape = 'u8[16384]{0}', space=vmem, size = 0x4000, scoped, tag = 'output window, operand 0']
    #allocation3 [shape = 's32[2]{0}', space=sflag, size = 0x8, scoped, tag = 'scoped memory for tpu_custom_call.1']
    %10 = vsyncpa [#allocation3], 0
    %s11 = scalar_lea.sflag [#allocation3], 1
    %12 = vsyncpa %s11, 0
    loop: start=0, step=1, limit=4
    $region2: #{tpu_custom_call.1} parent=1 // loop_pre_header
      _
    $region3: #{tpu_custom_call.1} parent=1 // loop_header
      %s14 = sphi 0, %s18
      %p15 = scmp.ge.s32.totalorder %s14, 4
      %s24 = sphi 0, %s26
      %s27 = sphi 0, %s24
      %s28 = sphi 0, %s27
      %s44 = sphi 0, %s28
      %s48 = sphi 0, %s48
      %s50 = sphi 0, %s48
      %s51 = sphi 0, %s50
      %s65 = sphi 0, %s51
      %s69 = sphi 0, %s69
      %s71 = sphi 0, %s69
      %s72 = sphi 0, %s71
      %s86 = sphi 0, %s72
      %s90 = sphi 0, %s90
      %s92 = sphi 0, %s90
      %s93 = sphi 0, %s92
      %s107 = sphi 0, %s93
      %s111 = sphi 0, %s111
      %s113 = sphi 0, %s111
      %s114 = sphi 0, %s113
      %s128 = sphi 0, %s114
      %s134 = sphi 0, %s136
      %s137 = sphi 0, %s134
      %s138 = sphi 0, %s137
      %s154 = sphi 0, %s138
    $region4: #{tpu_custom_call.1} parent=1 // loop_header_branch
      %17 = sbr.rel (%p15) target = $region8
    $region5: #{tpu_custom_call.1} parent=1 // loop_body
      %s19 = ssub.s32 %s14, 1
      %s20 = ssub.s32 %s14, 2
      %s21 = sadd.s32 %s14, 1
      %s22 = ssub.s32 %s14, %s21
      %p23 = scmp.eq.s32.totalorder %s22, 0
      %s25 = sadd.s32 %s24, 1
      %s26 = scalar_select %p23, %s24, %s25
      %p29 = pneg %p23
      %p30 = scmp.eq.s32.totalorder %s14, 1
      %p31 = por %p29, %p30
      %p32 = scmp.ne.s32.totalorder %s24, %s27
      %p33 = scmp.eq.s32.totalorder %s14, 0
      %p34 = por %p32, %p33
      %p35 = scmp.ne.s32.totalorder %s24, %s27
      %p36 = scmp.eq.s32.totalorder %s19, 1
      %p37 = por %p35, %p36
      %p38 = scmp.ne.s32.totalorder %s27, %s28
      %p39 = scmp.eq.s32.totalorder %s19, 0
      %p40 = por %p38, %p39
      %p41 = scmp.ne.s32.totalorder %s27, %s28
      %p42 = scmp.eq.s32.totalorder %s20, 1
      %p43 = por %p41, %p42
      %p45 = scmp.ne.s32.totalorder %s28, %s44
      %p46 = scmp.eq.s32.totalorder %s20, 0
      %p47 = por %p45, %p46
      %s49 = sadd.s32 %s48, 1
      %p52 = scmp.eq.s32.totalorder %s14, 1
      %p53 = scmp.ne.s32.totalorder %s48, %s50
      %p54 = scmp.eq.s32.totalorder %s14, 0
      %p55 = por %p53, %p54
      %p56 = scmp.ne.s32.totalorder %s48, %s50
      %p57 = scmp.eq.s32.totalorder %s19, 1
      %p58 = por %p56, %p57
      %p59 = scmp.ne.s32.totalorder %s50, %s51
      %p60 = scmp.eq.s32.totalorder %s19, 0
      %p61 = por %p59, %p60
      %p62 = scmp.ne.s32.totalorder %s50, %s51
      %p63 = scmp.eq.s32.totalorder %s20, 1
      %p64 = por %p62, %p63
      %p66 = scmp.ne.s32.totalorder %s51, %s65
      %p67 = scmp.eq.s32.totalorder %s20, 0
      %p68 = por %p66, %p67
      %s70 = sadd.s32 %s69, 1
      %p73 = scmp.eq.s32.totalorder %s14, 1
      %p74 = scmp.ne.s32.totalorder %s69, %s71
      %p75 = scmp.eq.s32.totalorder %s14, 0
      %p76 = por %p74, %p75
      %p77 = scmp.ne.s32.totalorder %s69, %s71
      %p78 = scmp.eq.s32.totalorder %s19, 1
      %p79 = por %p77, %p78
      %p80 = scmp.ne.s32.totalorder %s71, %s72
      %p81 = scmp.eq.s32.totalorder %s19, 0
      %p82 = por %p80, %p81
      %p83 = scmp.ne.s32.totalorder %s71, %s72
      %p84 = scmp.eq.s32.totalorder %s20, 1
      %p85 = por %p83, %p84
      %p87 = scmp.ne.s32.totalorder %s72, %s86
      %p88 = scmp.eq.s32.totalorder %s20, 0
      %p89 = por %p87, %p88
      %s91 = sadd.s32 %s90, 1
      %p94 = scmp.eq.s32.totalorder %s14, 1
      %p95 = scmp.ne.s32.totalorder %s90, %s92
      %p96 = scmp.eq.s32.totalorder %s14, 0
      %p97 = por %p95, %p96
      %p98 = scmp.ne.s32.totalorder %s90, %s92
      %p99 = scmp.eq.s32.totalorder %s19, 1
      %p100 = por %p98, %p99
      %p101 = scmp.ne.s32.totalorder %s92, %s93
      %p102 = scmp.eq.s32.totalorder %s19, 0
      %p103 = por %p101, %p102
      %p104 = scmp.ne.s32.totalorder %s92, %s93
      %p105 = scmp.eq.s32.totalorder %s20, 1
      %p106 = por %p104, %p105
      %p108 = scmp.ne.s32.totalorder %s93, %s107
      %p109 = scmp.eq.s32.totalorder %s20, 0
      %p110 = por %p108, %p109
      %s112 = sadd.s32 %s111, 1
      %p115 = scmp.eq.s32.totalorder %s14, 1
      %p116 = scmp.ne.s32.totalorder %s111, %s113
      %p117 = scmp.eq.s32.totalorder %s14, 0
      %p118 = por %p116, %p117
      %p119 = scmp.ne.s32.totalorder %s111, %s113
      %p120 = scmp.eq.s32.totalorder %s19, 1
      %p121 = por %p119, %p120
      %p122 = scmp.ne.s32.totalorder %s113, %s114
      %p123 = scmp.eq.s32.totalorder %s19, 0
      %p124 = por %p122, %p123
      %p125 = scmp.ne.s32.totalorder %s113, %s114
      %p126 = scmp.eq.s32.totalorder %s20, 1
      %p127 = por %p125, %p126
      %p129 = scmp.ne.s32.totalorder %s114, %s128
      %p130 = scmp.eq.s32.totalorder %s20, 0
      %p131 = por %p129, %p130
      %s132 = ssub.s32 %s14, %s21
      %p133 = scmp.eq.s32.totalorder %s132, 0
      %s135 = sadd.s32 %s134, 1
      %s136 = scalar_select %p133, %s134, %s135
      %p139 = pneg %p133
      %p140 = scmp.eq.s32.totalorder %s14, 1
      %p141 = por %p139, %p140
      %p142 = scmp.ne.s32.totalorder %s134, %s137
      %p143 = scmp.eq.s32.totalorder %s14, 0
      %p144 = por %p142, %p143
      %p145 = scmp.ne.s32.totalorder %s134, %s137
      %p146 = scmp.eq.s32.totalorder %s19, 1
      %p147 = por %p145, %p146
      %p148 = scmp.ne.s32.totalorder %s137, %s138
      %p149 = scmp.eq.s32.totalorder %s19, 0
      %p150 = por %p148, %p149
      %p151 = scmp.ne.s32.totalorder %s137, %s138
      %p152 = scmp.eq.s32.totalorder %s20, 1
      %p153 = por %p151, %p152
      %p155 = scmp.ne.s32.totalorder %s138, %s154
      %p156 = scmp.eq.s32.totalorder %s20, 0
      %p157 = por %p155, %p156
      %p158 = scmp.le.s32.totalorder 1, %s14
      %p159 = scmp.lt.s32.totalorder %s14, 3
      %p160 = pnand %p158, %p159
      %p161 = pneg %p160
      // Predicated region
      $region9: #{tpu_custom_call.1} parent=5 // pred_check
        _
      $region10: #{tpu_custom_call.1} parent=5 // pred_check_branch
        %163 = sbr.rel (%p160) target = $region12
      $region11: #{tpu_custom_call.1} parent=5 // pred_region
        %s164 = ssub.s32 %s14, 1
        // Predicated region
        $region13: #{tpu_custom_call.1} parent=11 // pred_check
          %p165 = pneg %p61
        $region14: #{tpu_custom_call.1} parent=11 // pred_check_branch
          %167 = sbr.rel (%p165) target = $region16
        $region15: #{tpu_custom_call.1} parent=11 // pred_region
          _
        $region16: #{tpu_custom_call.1} parent=11 // pred_fallthru
          _
        // Predicated region
        $region17: #{tpu_custom_call.1} parent=11 // pred_check
          %p168 = pneg %p82
        $region18: #{tpu_custom_call.1} parent=11 // pred_check_branch
          %170 = sbr.rel (%p168) target = $region20
        $region19: #{tpu_custom_call.1} parent=11 // pred_region
          _
        $region20: #{tpu_custom_call.1} parent=11 // pred_fallthru
          _
        // Predicated region
        $region21: #{tpu_custom_call.1} parent=11 // pred_check
          %p171 = pneg %p103
        $region22: #{tpu_custom_call.1} parent=11 // pred_check_branch
          %173 = sbr.rel (%p171) target = $region24
        $region23: #{tpu_custom_call.1} parent=11 // pred_region
          _
        $region24: #{tpu_custom_call.1} parent=11 // pred_fallthru
          _
        // Predicated region
        $region25: #{tpu_custom_call.1} parent=11 // pred_check
          %p174 = pneg %p124
        $region26: #{tpu_custom_call.1} parent=11 // pred_check_branch
          %176 = sbr.rel (%p174) target = $region28
        $region27: #{tpu_custom_call.1} parent=11 // pred_region
          _
        $region28: #{tpu_custom_call.1} parent=11 // pred_fallthru
          _
      $region12: #{tpu_custom_call.1} parent=5 // pred_fallthru
        _
      %p177 = scmp.lt.s32.totalorder %s14, 2
      // Predicated region
      $region29: #{tpu_custom_call.1} parent=5 // pred_check
        %p178 = pneg %p177
      $region30: #{tpu_custom_call.1} parent=5 // pred_check_branch
        %180 = sbr.rel (%p178) target = $region32
      $region31: #{tpu_custom_call.1} parent=5 // pred_region
        // Predicated region
        $region33: #{tpu_custom_call.1} parent=31 // pred_check
          %p181 = pneg %p34
        $region34: #{tpu_custom_call.1} parent=31 // pred_check_branch
          %183 = sbr.rel (%p181) target = $region36
        $region35: #{tpu_custom_call.1} parent=31 // pred_region
          %s184 = smul.u32 2, %s14
          %p185 = scmp.lt.s32.totalorder %s184, 3
          %s186 = scalar_select %p185, %s184, 3
          %s187 = smul.addr %s186, 2
          %s188 = scalar_lea.vmem %s0, %s187
          %s189 = smul.u32 2, %s14
        $region36: #{tpu_custom_call.1} parent=31 // pred_fallthru
          _
      $region32: #{tpu_custom_call.1} parent=5 // pred_fallthru
        _
      %p190 = scmp.le.s32.totalorder 1, %s14
      %p191 = scmp.lt.s32.totalorder %s14, 3
      %p192 = pnand %p190, %p191
      %p193 = pneg %p192
      // Predicated region
      $region37: #{tpu_custom_call.1} parent=5 // pred_check
        _
      $region38: #{tpu_custom_call.1} parent=5 // pred_check_branch
        %195 = sbr.rel (%p192) target = $region40
      $region39: #{tpu_custom_call.1} parent=5 // pred_region
        %s196 = ssub.s32 %s14, 1
        %s197 = smul.u32 2, %s19
        %p198 = scmp.lt.s32.totalorder %s197, 3
        %s199 = scalar_select %p198, %s197, 3
        %s200 = smul.addr %s199, 2
        %s201 = scalar_lea.vmem %s0, %s200
        %p202 = pneg %p40
        %p203 = pneg %p37
        %p204 = pneg %p61
        %p205 = pneg %p58
        %p206 = pneg %p82
        %p207 = pneg %p79
        %p208 = pneg %p103
        %p209 = pneg %p100
        %p210 = pneg %p124
        %p211 = pneg %p121
        %p212 = pneg %p150
        %p213 = pneg %p147
        %s214 = sand.u32 %s137, 1
        %s215 = scalar_lea.sflag [#allocation3], %s214
        %s216 = sand.u32 %s137, 1
        %s217 = smul.addr %s216, 16
        %s218 = scalar_lea.vmem [#allocation2], %s217
        %s219 = smul.u32 2, %s19
        %p220 = scmp.lt.s32.totalorder %s219, 3
        %s221 = scalar_select %p220, %s219, 3
        %s222 = smul.addr %s221, 2
        %s223 = scalar_lea.vmem %s0, %s222
        %s224 = smul.u32 2, %s19
        %s225 = smul.u32 2, %s19
        %v226 = vld [vmem:[%s2] sm:$0xff]
        %v227 = vld [vmem:[%s2 + $0x8] sm:$0xff]
        %v228 = vld [vmem:[%s2 + $0x10] sm:$0xf]
        %v229 = vld [vmem:[%s1] sm:$0xff]
        %v230 = vld [vmem:[%s1 + $0x8] sm:$0xff]
        %v231 = vld [vmem:[%s1 + $0x10] sm:$0xf]
        %v232 = vld [vmem:[%s223] ss:$2 sm:$0x3]
        %234 = vset.pattern.permute.xlu0 0
        %235 = vperm.xlu0 %234, %v229
        %v236 = vpop.permute.xlu0 %235
        %239 = vset.pattern.permute.xlu0 0
        %240 = vperm.xlu0 %239, %v230
        %v241 = vpop.permute.xlu0 %240
        %244 = vset.pattern.permute.xlu0 0
        %245 = vperm.xlu0 %244, %v231
        %v246 = vpop.permute.xlu0 %245
        %v249 = vperm.slane %v232, 0
        %v250 = vperm.slane %v232, 1
        %v253 = vmul.f32 %v236, %v249
        %v254 = vmul.f32 %v236, %v250
        %v255 = vmul.f32 %v241, %v249
        %v256 = vmul.f32 %v241, %v250
        %v257 = vmul.f32 %v246, %v249
        %v258 = vmul.f32 %v246, %v250
        %260 = vset.pattern.permute.xlu0 0
        %261 = vperm.xlu0 %260, %v226
        %v262 = vpop.permute.xlu0 %261
        %265 = vset.pattern.permute.xlu0 0
        %266 = vperm.xlu0 %265, %v227
        %v267 = vpop.permute.xlu0 %266
        %270 = vset.pattern.permute.xlu0 0
        %271 = vperm.xlu0 %270, %v228
        %v272 = vpop.permute.xlu0 %271
        %v274 = vadd.f32 %v262, %v253
        %v275 = vadd.f32 %v262, %v254
        %v276 = vadd.f32 %v267, %v255
        %v277 = vadd.f32 %v267, %v256
        %v278 = vadd.f32 %v272, %v257
        %v279 = vadd.f32 %v272, %v258
        %s280 = scalar_lea.vmem %s223, 1
        %v281 = vld [vmem:[%s280] ss:$2 sm:$0x3]
        %282 = vset.pattern.permute.xlu0 1
        %283 = vperm.xlu0 %282, %v229
        %v284 = vpop.permute.xlu0 %283
        %286 = vset.pattern.permute.xlu0 1
        %287 = vperm.xlu0 %286, %v230
        %v288 = vpop.permute.xlu0 %287
        %290 = vset.pattern.permute.xlu0 1
        %291 = vperm.xlu0 %290, %v231
        %v292 = vpop.permute.xlu0 %291
        %v295 = vperm.slane %v281, 0
        %v296 = vperm.slane %v281, 1
        %v299 = vmul.f32 %v284, %v295
        %v300 = vmul.f32 %v284, %v296
        %v301 = vmul.f32 %v288, %v295
        %v302 = vmul.f32 %v288, %v296
        %v303 = vmul.f32 %v292, %v295
        %v304 = vmul.f32 %v292, %v296
        %v305 = vadd.f32 %v274, %v299
        %v306 = vadd.f32 %v275, %v300
        %v307 = vadd.f32 %v276, %v301
        %v308 = vadd.f32 %v277, %v302
        %v309 = vadd.f32 %v278, %v303
        %v310 = vadd.f32 %v279, %v304
        %v311 = vmax.f32 %v305, 0.0
        %v312 = vmax.f32 %v306, 0.0
        %v313 = vmax.f32 %v307, 0.0
        %v314 = vmax.f32 %v308, 0.0
        %v315 = vmax.f32 %v309, 0.0
        %v316 = vmax.f32 %v310, 0.0
        %v317 = vld [vmem:[%s3] sm:$0x3f]
        %v318 = vld [vmem:[%s4] sm:$0x3f]
        %320 = vset.pattern.permute.xlu0 0
        %321 = vperm.xlu0 %320, %v318
        %v322 = vpop.permute.xlu0 %321
        %vm324 = vcmask 162816
        %v326 = vsel %vm324, %v317, 0
        %vm328 = vcmask 1043456
        %v330 = vsel %vm328, %v315, 0
        %v333 = vsel %vm328, %v316, 0
        %335 = vmatpush.msra.mxu0 0.0
        %336 = vmatpush.msra.mxu0 0.0
        %337 = vmatpush.msra.mxu0 0.0
        %338 = vmatpush.msra.mxu0 0.0
        %339 = vmatpush.msra.mxu0 0.0
        %340 = vmatpush.msra.mxu0 0.0
        %341 = vmatpush.msra.mxu0 0.0
        %342 = vmatpush.msra.mxu0 0.0
        %343 = vmatpush.msra.mxu0 0.0
        %344 = vmatpush.msra.mxu0 0.0
        %345 = vmatpush.msra.mxu0 0.0
        %346 = vmatpush.msra.mxu0 0.0
        %347 = vmatpush.msra.mxu0 0.0
        %348 = vmatpush.msra.mxu0 %v330
        %349 = vmatpush.msra.mxu0 %v313
        %350 = vmatpush.msra.mxu0 %v311
        %351 = vmatmul.f32.gmra.mxu0 %v326
        %v352 = vpop.f32.mrf.mxu0
        %v353 = vadd.f32 %v322, %v352
        %354 = vdwg.mxu0
        %355 = vmatpush.msra.mxu0 0.0
        %356 = vmatpush.msra.mxu0 0.0
        %357 = vmatpush.msra.mxu0 0.0
        %358 = vmatpush.msra.mxu0 0.0
        %359 = vmatpush.msra.mxu0 0.0
        %360 = vmatpush.msra.mxu0 0.0
        %361 = vmatpush.msra.mxu0 0.0
        %362 = vmatpush.msra.mxu0 0.0
        %363 = vmatpush.msra.mxu0 0.0
        %364 = vmatpush.msra.mxu0 0.0
        %365 = vmatpush.msra.mxu0 0.0
        %366 = vmatpush.msra.mxu0 0.0
        %367 = vmatpush.msra.mxu0 0.0
        %368 = vmatpush.msra.mxu0 %v333
        %369 = vmatpush.msra.mxu0 %v314
        %370 = vmatpush.msra.mxu0 %v312
        %371 = vmatmul.f32.gmra.mxu0 %v326
        %v372 = vpop.f32.mrf.mxu0
        %v373 = vadd.f32 %v322, %v372
        %374 = vdwg.mxu0
        %vm375 = vcmask 1045504
        %v376 = vsel %vm375, %v353, -inf
        %v377 = vrot.slane %v376, 4
        %v378 = vmax.f32 %v376, %v377
        %v379 = vrot.slane %v378, 2
        %v380 = vmax.f32 %v378, %v379
        %v381 = vrot.slane %v380, 1
        %v382 = vmax.f32 %v380, %v381
        %v383 = vsel %vm375, %v373, -inf
        %v384 = vrot.slane %v383, 4
        %v385 = vmax.f32 %v383, %v384
        %v386 = vrot.slane %v385, 2
        %v387 = vmax.f32 %v385, %v386
        %v388 = vrot.slane %v387, 1
        %v389 = vmax.f32 %v387, %v388
        %v390 = vsub.f32 %v353, %v382
        %v391 = vsub.f32 %v373, %v389
        %v392 = vmul.f32 %v390, 1.442695
        %v393 = vpow.pop %v392
        %v394 = vmul.f32 %v391, 1.442695
        %v395 = vpow.pop %v394
        %v396 = vsel %vm375, %v393, 0.0
        %v397 = vrot.slane %v396, 4
        %v398 = vadd.f32 %v396, %v397
        %v399 = vrot.slane %v398, 2
        %v400 = vadd.f32 %v398, %v399
        %v401 = vrot.slane %v400, 1
        %v402 = vadd.f32 %v400, %v401
        %v403 = vsel %vm375, %v395, 0.0
        %v404 = vrot.slane %v403, 4
        %v405 = vadd.f32 %v403, %v404
        %v406 = vrot.slane %v405, 2
        %v407 = vadd.f32 %v405, %v406
        %v408 = vrot.slane %v407, 1
        %v409 = vadd.f32 %v407, %v408
        %v410 = vrcp.pop %v402
        %v411 = vmul.f32 %v402, %v410
        %v412 = vsub.f32 1.0, %v411
        %v413 = vmul.f32 %v410, %v412
        %v414 = vadd.f32 %v410, %v413
        %vm415 = vweird.f32 %v402
        %vm416 = vweird.f32 %v410
        %vm417 = vmor %vm415, %vm416
        %v418 = vsel %vm417, %v410, %v414
        %v419 = vand.u32 2147483647, %v402
        %vm420 = vcmp.eq.f32.partialorder %v419, 8.507059e+37
        %v421 = vand.u32 %v402, 2147483648
        %v422 = vor.u32 1.1754944e-38, %v421
        %v423 = vsel %vm420, %v422, %v418
        %v424 = vmul.f32 %v393, %v423
        %v425 = vrcp.pop %v409
        %v426 = vmul.f32 %v409, %v425
        %v427 = vsub.f32 1.0, %v426
        %v428 = vmul.f32 %v425, %v427
        %v429 = vadd.f32 %v425, %v428
        %vm430 = vweird.f32 %v409
        %vm431 = vweird.f32 %v425
        %vm432 = vmor %vm430, %vm431
        %v433 = vsel %vm432, %v425, %v429
        %v434 = vand.u32 2147483647, %v409
        %vm435 = vcmp.eq.f32.partialorder %v434, 8.507059e+37
        %v436 = vand.u32 %v409, 2147483648
        %v437 = vor.u32 1.1754944e-38, %v436
        %v438 = vsel %vm435, %v437, %v433
        %v439 = vmul.f32 %v395, %v438
        %440 = vst [vmem:[%s218] sm:$0x3f] %v424
        %441 = vst [vmem:[%s218 + $0x8] sm:$0x3f] %v439
        %s442 = sand.u32 %s137, 1
        %s443 = scalar_lea.sflag [#allocation3], %s442
        %s444 = sand.u32 %s137, 1
        %s445 = smul.addr %s444, 16
        %s446 = scalar_lea.vmem [#allocation2], %s445
        // Predicated region
        $region41: #{tpu_custom_call.1} parent=39 // pred_check
          %p447 = pneg %p147
        $region42: #{tpu_custom_call.1} parent=39 // pred_check_branch
          %449 = sbr.rel (%p447) target = $region44
        $region43: #{tpu_custom_call.1} parent=39 // pred_region
          %s450 = smul.u32 2, %s19
          %452 = vsyncadd %s443, 0
          %s453 = smul.addr %s450, 8
          %s454 = scalar_lea.hbm %s5, %s453
          %s456 = sshll.u32 %s446, 4
          %s457 = int_to_ptr.vmem [resolvable:$true] %s456
          %s458 = sshll.u32 %s454, 4
          %s459 = int_to_ptr.hbm [resolvable:$true] %s458
          %461 = dma.vmem_to_hbm [thread:$0]  %s457, 256, %s459, %s443
        $region44: #{tpu_custom_call.1} parent=39 // pred_fallthru
          _
      $region40: #{tpu_custom_call.1} parent=5 // pred_fallthru
        _
      %p462 = scmp.le.s32.totalorder 2, %s14
      // Predicated region
      $region45: #{tpu_custom_call.1} parent=5 // pred_check
        %p463 = pneg %p462
      $region46: #{tpu_custom_call.1} parent=5 // pred_check_branch
        %465 = sbr.rel (%p463) target = $region48
      $region47: #{tpu_custom_call.1} parent=5 // pred_region
        %s466 = ssub.s32 %s14, 2
        // Predicated region
        $region49: #{tpu_custom_call.1} parent=47 // pred_check
          %p467 = pneg %p153
        $region50: #{tpu_custom_call.1} parent=47 // pred_check_branch
          %469 = sbr.rel (%p467) target = $region52
        $region51: #{tpu_custom_call.1} parent=47 // pred_region
          %s470 = sand.u32 %s138, 1
          %s471 = scalar_lea.sflag [#allocation3], %s470
          %s472 = sand.u32 %s138, 1
          %s473 = smul.addr %s472, 16
          %s474 = scalar_lea.vmem [#allocation2], %s473
          %476 = dma.done %s471, 256
        $region52: #{tpu_custom_call.1} parent=47 // pred_fallthru
          _
      $region48: #{tpu_custom_call.1} parent=5 // pred_fallthru
        _
    $region6: #{tpu_custom_call.1} parent=1 // loop_footer
      %s18 = sadd.s32 1, %s14
    $region7: #{tpu_custom_call.1} parent=1 // loop_footer_branch
      %13 = sbr.rel target = $region3
    $region8: #{tpu_custom_call.1} parent=1 // loop_exit
      _
    %477 = vsyncpa [#allocation3], 1
    %s478 = scalar_lea.sflag [#allocation3], 1
    %479 = vsyncpa %s478, 1

</llo_original>
